<compile_context>
chip_gen: v5e
topology: v5e:2x2
jax: 0.10.0
libtpu: 0.0.40
codegen_flags: <defaults>
</compile_context>

<pallas_src>
import math

import jax
import jax.numpy as jnp
from jax.experimental import pallas as pl
from jax.experimental.pallas import tpu as pltpu

_LANE = 128
_TR_CAP = 2048                 # caps the padded (TR, 128) rnd VMEM buffer
_SPLIT_BYTES = 512 * 1024      # force >=2 grid blocks above this size


def _cdiv(a, b):
    return -(-a // b)


def _round_up(a, b):
    return _cdiv(a, b) * b


def _sublane_multiple(dtype):
    # 8 for f32, 16 for bf16/f16, 32 for int8/fp8.
    return max(8, 32 // jnp.dtype(dtype).itemsize)


def _tile_budget_bytes():
    # v7x: ~3.2 TB/s HBM but only 64 MiB VMEM/TC -> bigger tiles (4 MiB) to keep
    # the ~0.35us/step overhead small.  v5e/v6e: 2 MiB tiles already sit at
    # ~85% of the HBM roofline and stay under v5e's 16 MiB scoped default.
    try:
        vmem = getattr(pltpu.get_tpu_info(), "vmem_capacity_bytes", 128 << 20)
        return (4 << 20) if vmem <= (80 << 20) else (2 << 20)
    except Exception:
        return 2 << 20


def _pick_tiles(R, F, itemsize, sub, budget):
    """Byte-budgeted (TR, TF): widen the lane dim first, then grow rows."""
    max_tf = max(_LANE, (budget // (sub * itemsize)) // _LANE * _LANE)
    TF = F if F <= max_tf else max_tf                 # full dim or 128-multiple
    TR = min(R, _TR_CAP, max(sub, budget // (TF * itemsize)))
    if TR < R:
        TR = max(sub, (TR // sub) * sub)              # sublane multiple
    # Guarantee >=2 grid blocks for non-trivial sizes so v7x's second
    # TensorCore is not idle (one extra grid step elsewhere, ~0.35us).
    if R * F * itemsize > _SPLIT_BYTES and _cdiv(R, TR) * _cdiv(F, TF) < 2:
        if R >= 2 * sub:
            TR = _round_up(_cdiv(R, 2), sub)
        elif F >= 2 * _LANE:
            TF = _round_up(_cdiv(F, 2), _LANE)
    return TR, TF


def _compiler_params(TR, TF, itemsize, extra_bytes=0):
    tile = TR * TF * itemsize
    rnd_buf = TR * _LANE * itemsize     # (TR, <128) blocks pad to 128 lanes in VMEM
    need = 4 * tile + 2 * rnd_buf + extra_bytes + (2 << 20)
    return pltpu.CompilerParams(
        dimension_semantics=("parallel", "parallel"),
        vmem_limit_bytes=int(min(max(need, 16 << 20), 64 << 20)),
    )


# --------------------------------------------------------------------------
# Standard path: F >= 128.  x viewed as (R, F), rnd as (R, 1).
# --------------------------------------------------------------------------
def _gdrop_kernel(x_ref, rnd_ref, o_ref):
    # Broadcast multiply fused into the single pass over x (VPU slack is free
    # in a memory-bound stream).
    o_ref[...] = x_ref[...] * rnd_ref[...]


def _gdrop_rows(x2, rnd2):
    R, F = x2.shape
    itemsize = jnp.dtype(x2.dtype).itemsize
    sub = _sublane_multiple(x2.dtype)
    TR, TF = _pick_tiles(R, F, itemsize, sub, _tile_budget_bytes())
    grid = (pl.cdiv(R, TR), pl.cdiv(F, TF))
    return pl.pallas_call(
        _gdrop_kernel,
        out_shape=jax.ShapeDtypeStruct((R, F), x2.dtype),
        grid_spec=pltpu.PrefetchScalarGridSpec(
            num_scalar_prefetch=0,
            grid=grid,
            in_specs=[
                pl.BlockSpec((TR, TF), lambda i, j: (i, j)),
                # (TR, 1) block: tiny DMA, re-issued only when the row-block
                # index changes; TR is capped so its 128-lane VMEM padding
                # stays small.
                pl.BlockSpec((TR, 1), lambda i, j: (i, 0)),
            ],
            out_specs=pl.BlockSpec((TR, TF), lambda i, j: (i, j)),
        ),
        compiler_params=_compiler_params(TR, TF, itemsize),
        input_output_aliases={0: 0},   # reuse x's HBM buffer when x is dead
    )(x2, rnd2)


# --------------------------------------------------------------------------
# Grouped path: F < 128.  m consecutive rows regrouped so the lane dim is
# m*F (multiple of 128); the m multipliers are expanded in-kernel with a tiny
# MXU matmul against a one-hot expansion matrix (MXU is idle here -> free).
# --------------------------------------------------------------------------
def _gdrop_grouped_kernel(x_ref, rnd_ref, exp_ref, o_ref):
    rnd_exp = jnp.dot(rnd_ref[...], exp_ref[...],
                      preferred_element_type=jnp.float32)
    o_ref[...] = x_ref[...] * rnd_exp.astype(x_ref.dtype)


def _gdrop_grouped(x2, rnd2, expand):
    Rg, FP = x2.shape
    m = rnd2.shape[1]
    itemsize = jnp.dtype(x2.dtype).itemsize
    sub = _sublane_multiple(x2.dtype)
    TR, TF = _pick_tiles(Rg, FP, itemsize, sub, _tile_budget_bytes())
    grid = (pl.cdiv(Rg, TR), pl.cdiv(FP, TF))
    return pl.pallas_call(
        _gdrop_grouped_kernel,
        out_shape=jax.ShapeDtypeStruct((Rg, FP), x2.dtype),
        grid_spec=pltpu.PrefetchScalarGridSpec(
            num_scalar_prefetch=0,
            grid=grid,
            in_specs=[
                pl.BlockSpec((TR, TF), lambda i, j: (i, j)),
                pl.BlockSpec((TR, m), lambda i, j: (i, 0)),
                pl.BlockSpec((m, TF), lambda i, j: (0, j)),
            ],
            out_specs=pl.BlockSpec((TR, TF), lambda i, j: (i, j)),
        ),
        compiler_params=_compiler_params(
            TR, TF, itemsize, extra_bytes=2 * max(m, sub) * TF * itemsize),
        input_output_aliases={0: 0},
    )(x2, rnd2, expand)


# --------------------------------------------------------------------------
# Public wrapper: matches generalized_drop_out.forward(x, deterministic).
# --------------------------------------------------------------------------
def generalized_drop_out(x, key, *, mode="mul", strength=0.4, axes=(0, 1),
                         normalize=False, deterministic=False):
    mode = mode.lower()
    assert mode in ("mul", "drop", "prop"), "Invalid GDropLayer mode"
    axes = [axes] if isinstance(axes, int) else list(axes)

    if deterministic or not strength:
        return x

    rnd_shape = tuple(s if a in axes else 1 for a, s in enumerate(x.shape))

    if mode == "drop":
        p = 1.0 - strength
        rnd = jax.random.bernoulli(key, p, rnd_shape).astype(jnp.float32) / p
    elif mode == "mul":
        rnd = (1.0 + strength) ** jax.random.normal(key, rnd_shape, jnp.float32)
    else:  # 'prop'
        coef = strength * (x.shape[1] ** 0.5)
        rnd = jax.random.normal(key, rnd_shape, jnp.float32) * coef + 1.0

    if normalize:
        rnd = rnd / jnp.sqrt(jnp.sum(rnd * rnd))
    rnd = rnd.astype(x.dtype)

    # Fused path requires the (valid) axes to be a leading prefix: rnd then
    # varies only over the leading dims -> view x as (R, F), rnd as (R, 1).
    valid_axes = sorted(a for a in axes if 0 <= a < x.ndim)
    is_prefix = bool(valid_axes) and valid_axes == list(range(len(valid_axes)))
    if not is_prefix:
        # TODO(synk): non-prefix `axes` broadcast patterns are not fused into
        # the Pallas kernel; fall back to a plain JAX broadcast multiply.
        return x * rnd

    k = len(valid_axes)
    R = math.prod(x.shape[:k])
    F = math.prod(x.shape[k:])

    if F >= _LANE:
        out2 = _gdrop_rows(jnp.reshape(x, (R, F)), jnp.reshape(rnd, (R, 1)))
        return jnp.reshape(out2, x.shape)

    if F > 0:
        # Narrow trailing extent (common for deep conv features, e.g. 512x4x4):
        # regroup rows so the lane dim is a multiple of 128.
        m = _LANE // math.gcd(F, _LANE)
        if R % m == 0:
            Rg, FP = R // m, m * F
            expand = (jnp.arange(FP)[None, :] // F ==
                      jnp.arange(m)[:, None]).astype(x.dtype)
            out2 = _gdrop_grouped(jnp.reshape(x, (Rg, FP)),
                                  jnp.reshape(rnd, (Rg, m)), expand)
            return jnp.reshape(out2, x.shape)

    # TODO(synk): tiny / un-groupable trailing extent; plain XLA multiply.
    return x * rnd


if __name__ == "__main__":
    key = jax.random.PRNGKey(0)
    kx, kr, kx2, kr2 = jax.random.split(key, 4)

    # --- standard fused path: NCHW feature map, F = H*W = 256 >= 128 ---------
    x = jax.random.normal(kx, (2, 4, 16, 16), dtype=jnp.float32)
    rnd_ref = (1.0 + 0.4) ** jax.random.normal(kr, (2, 4, 1, 1), jnp.float32)
    ref = x * rnd_ref.astype(x.dtype)

    out = generalized_drop_out(x, kr, mode="mul", strength=0.4,
                               axes=(0, 1), normalize=False,
                               deterministic=False)
    out = jax.block_until_ready(out)
    assert out.shape == x.shape, out.shape
    assert out.dtype == x.dtype, out.dtype
    assert bool(jnp.allclose(out, ref, rtol=1e-6, atol=1e-6))

    # deterministic=True path must return x untouched.
    out_det = generalized_drop_out(x, kr, deterministic=True)
    assert bool(jnp.array_equal(out_det, x))

    # 'drop' mode runs through the same kernel.
    out_drop = jax.block_until_ready(
        generalized_drop_out(x, kr, mode="drop", strength=0.4))
    assert out_drop.shape == x.shape

    # --- grouped (narrow-F) fused path: F = H*W = 16 < 128 -------------------
    xg = jax.random.normal(kx2, (2, 64, 4, 4), dtype=jnp.float32)
    rnd_g = (1.0 + 0.4) ** jax.random.normal(kr2, (2, 64, 1, 1), jnp.float32)
    ref_g = xg * rnd_g.astype(xg.dtype)
    out_g = jax.block_until_ready(
        generalized_drop_out(xg, kr2, mode="mul", strength=0.4))
    assert bool(jnp.allclose(out_g, ref_g, rtol=1e-6, atol=1e-6))

    # --- bf16 exercises the dtype-aware (16-sublane) tiling ------------------
    xb = x.astype(jnp.bfloat16)
    ref_b = xb * rnd_ref.astype(jnp.bfloat16)
    out_b = jax.block_until_ready(
        generalized_drop_out(xb, kr, mode="mul", strength=0.4))
    assert out_b.dtype == jnp.bfloat16
    assert bool(jnp.allclose(out_b.astype(jnp.float32),
                             ref_b.astype(jnp.float32), rtol=2e-2, atol=2e-2))

    print("KERNEL_OK")
</pallas_src>

<mosaic_0001>
module attributes {stable_mosaic.version = 11 : i64} {
  func.func @_gdrop_kernel(%arg0: i32, %arg1: i32, %arg2: memref<8x256xf32, #tpu.memory_space<vmem>>, %arg3: memref<8x1xf32, #tpu.memory_space<vmem>>, %arg4: memref<8x256xf32, #tpu.memory_space<vmem>>) attributes {dimension_semantics = [#tpu.dimension_semantics<parallel>, #tpu.dimension_semantics<parallel>], iteration_bounds = array<i64: 1, 1>, scalar_prefetch = 0 : i64, scratch_operands = 0 : i64, tpu.core_type = #tpu.core_type<tc>, window_params = [{transform_indices = @transform_0, window_bounds = array<i64: 8, 256>}, {transform_indices = @transform_1, window_bounds = array<i64: 8, 1>}, {transform_indices = @transform_2, window_bounds = array<i64: 8, 256>}]} {
    %c0 = arith.constant 0 : index
    %c0_0 = arith.constant 0 : index
    %0 = vector.load %arg2[%c0, %c0_0] : memref<8x256xf32, #tpu.memory_space<vmem>>, vector<8x256xf32>
    %c0_1 = arith.constant 0 : index
    %c0_2 = arith.constant 0 : index
    %1 = vector.load %arg3[%c0_1, %c0_2] : memref<8x1xf32, #tpu.memory_space<vmem>>, vector<8x1xf32>
    %2 = vector.broadcast %1 : vector<8x1xf32> to vector<8x256xf32>
    %3 = arith.mulf %0, %2 : vector<8x256xf32>
    %c0_3 = arith.constant 0 : index
    %c0_4 = arith.constant 0 : index
    %4 = vector.load %arg4[%c0_3, %c0_4] : memref<8x256xf32, #tpu.memory_space<vmem>>, vector<8x256xf32>
    tpu.vector_store %arg4[%c0_3, %c0_4], %3 {strides = array<i32>} : memref<8x256xf32, #tpu.memory_space<vmem>>, vector<8x256xf32>,
    return
  }
  func.func @transform_0(%arg0: i32, %arg1: i32) -> (i32, i32) {
    %c0_i32 = arith.constant 0 : i32
    return %arg0, %arg1 : i32, i32
  }
  func.func @transform_1(%arg0: i32, %arg1: i32) -> (i32, i32) {
    %c0_i32 = arith.constant 0 : i32
    %c0_i32_0 = arith.constant 0 : i32
    return %arg0, %c0_i32 : i32, i32
  }
  func.func @transform_2(%arg0: i32, %arg1: i32) -> (i32, i32) {
    %c0_i32 = arith.constant 0 : i32
    return %arg0, %arg1 : i32, i32
  }
}

</mosaic_0001>

<llo_original>
// kernel: tpu_custom_call.1
$region0: #{tpu_custom_call.1}
  #allocation0 [shape = 'u32[]', space=smem, size = 0x4, offset = 0x4, fixed_abs, tag = 'smem constant byte address 0x4 - core index']
  #allocation1 [shape = 'u32[72,128]{1,0:T(1,128)}', space=vmem, size = 0x9000, scoped, tag = 'internal scratch']
  %s0 = inlined_call_operand.hbm [shape: f32[8,256], index: 0, kind: input, shape index: {}, may-alias: {0,2}]
  %s1 = inlined_call_operand.vmem [shape: f32[8,1], index: 1, kind: input, shape index: {}]
  %s2 = inlined_call_operand.hbm [shape: f32[8,256], index: 2, kind: output, shape index: {}, may-alias: {0,2}]
  %s3 = sld [smem:[#allocation0]]
  $region22: #{tpu_custom_call.1} parent=0
    _
  %s5 = ssub.s32 1, %s3
  %s6 = scalar_select 0, %s5, %s3
  $region1: #{tpu_custom_call.1} parent=0
    #allocation2 [shape = 'u8[8192]{0}', space=vmem, size = 0x2000, scoped, tag = 'input window, operand 0, single buffered']
    #allocation3 [shape = 's32[1]{0}', space=sflag, size = 0x4, scoped, tag = 'scoped memory for tpu_custom_call.1']
    #allocation4 [shape = 's32[1]{0}', space=sflag, size = 0x4, scoped, tag = 'scoped memory for tpu_custom_call.1']
    #allocation5 [shape = 'u8[8192]{0}', space=vmem, size = 0x2000, scoped, tag = 'output window, operand 0, single buffered']
    %7 = vsyncpa [#allocation3], 0
    %8 = vsyncpa [#allocation4], 0
    // Predicated region
    $region2: #{tpu_custom_call.1} parent=1 // pred_check
      _
    $region3: #{tpu_custom_call.1} parent=1 // pred_check_branch
      %10 = sbr.rel (0) target = $region5
    $region4: #{tpu_custom_call.1} parent=1 // pred_region
      %12 = vsyncadd [#allocation3], 0
      %s14 = sshll.u32 %s0, 4
      %s15 = int_to_ptr.hbm [resolvable:$true] %s14
      %s16 = sshll.u32 [#allocation2], 4
      %s17 = int_to_ptr.vmem [resolvable:$true] %s16
      %19 = dma.hbm_to_vmem [thread:$0]  %s15, 256, %s17, [#allocation3]
    $region5: #{tpu_custom_call.1} parent=1 // pred_fallthru
      _
    // Predicated region
    $region6: #{tpu_custom_call.1} parent=1 // pred_check
      _
    $region7: #{tpu_custom_call.1} parent=1 // pred_check_branch
      %21 = sbr.rel (0) target = $region9
    $region8: #{tpu_custom_call.1} parent=1 // pred_region
      _
    $region9: #{tpu_custom_call.1} parent=1 // pred_fallthru
      _
    // Predicated region
    $region10: #{tpu_custom_call.1} parent=1 // pred_check
      _
    $region11: #{tpu_custom_call.1} parent=1 // pred_check_branch
      %23 = sbr.rel (0) target = $region13
    $region12: #{tpu_custom_call.1} parent=1 // pred_region
      %25 = dma.done [#allocation3], 256
    $region13: #{tpu_custom_call.1} parent=1 // pred_fallthru
      _
    %v26 = vld [vmem:[#allocation2] sm:$0xff]
    %v27 = vld [vmem:[#allocation2 + $0x8] sm:$0xff]
    %v28 = vld [vmem:[%s1] sm:$0xff]
    %30 = vset.pattern.permute.xlu0 0
    %31 = vperm.xlu0 %30, %v28
    %v32 = vpop.permute.xlu0 %31
    %v34 = vmul.f32 %v26, %v32
    %v35 = vmul.f32 %v27, %v32
    %36 = vst [vmem:[#allocation5] sm:$0xff] %v34
    %37 = vst [vmem:[#allocation5 + $0x8] sm:$0xff] %v35
    // Predicated region
    $region14: #{tpu_custom_call.1} parent=1 // pred_check
      _
    $region15: #{tpu_custom_call.1} parent=1 // pred_check_branch
      %39 = sbr.rel (0) target = $region17
    $region16: #{tpu_custom_call.1} parent=1 // pred_region
      %41 = vsyncadd [#allocation4], 0
      %s43 = sshll.u32 [#allocation5], 4
      %s44 = int_to_ptr.vmem [resolvable:$true] %s43
      %s45 = sshll.u32 %s2, 4
      %s46 = int_to_ptr.hbm [resolvable:$true] %s45
      %48 = dma.vmem_to_hbm [thread:$0]  %s44, 256, %s46, [#allocation4]
    $region17: #{tpu_custom_call.1} parent=1 // pred_fallthru
      _
    // Predicated region
    $region18: #{tpu_custom_call.1} parent=1 // pred_check
      _
    $region19: #{tpu_custom_call.1} parent=1 // pred_check_branch
      %50 = sbr.rel (0) target = $region21
    $region20: #{tpu_custom_call.1} parent=1 // pred_region
      %52 = dma.done [#allocation4], 256
    $region21: #{tpu_custom_call.1} parent=1 // pred_fallthru
      _
    %53 = vsyncpa [#allocation3], 1
    %54 = vsyncpa [#allocation4], 1

</llo_original>
